<compile_context>
chip_gen: v7x
topology: tpu7x:2x2x1
jax: 0.10.0
libtpu: 0.0.40
codegen_flags: <defaults>
</compile_context>

<pallas_src>
import jax
import jax.numpy as jnp
from jax import lax
from jax.experimental import pallas as pl
from jax.experimental.pallas import tpu as pltpu

_LANE = 128
_SUBLANE = 8


def _round_up(x, m):
    return (x + m - 1) // m * m


def _linear_kernel(x_ref, w_ref, b_ref, o_ref):
    # x_ref: (TM, D), w_ref: (OUT, D), b_ref: (OUT, 1), o_ref: (OUT, TM)
    # Contract on D (last dim of both operands) -> (OUT, TM). No transposes.
    y = lax.dot_general(
        w_ref[...],
        x_ref[...],
        dimension_numbers=(((1,), (1,)), ((), ())),
        preferred_element_type=jnp.float32,
    )
    # Bias broadcast along the lane (batch) axis; added once per output tile.
    o_ref[...] = y + b_ref[...]


def _choose_batch_tile(B, D, OUT, *, block_rows=None,
                       vmem_budget_bytes=24 << 20, max_tile=32768):
    """Pick the batch tile TM.

    - If the caller forces block_rows, honor it (rounded to a 128 multiple
      when tiling is actually needed).
    - Otherwise size the tile from a VMEM budget that covers the Pallas
      double-buffered x block (D lane-padded to 128) and output block
      (OUT sublane-padded to 8), cap at max_tile, and guarantee at least two
      grid steps so v7x's two TensorCores both get work.
    """
    if block_rows is not None:
        if B <= block_rows:
            return B
        return max(_LANE, (block_rows // _LANE) * _LANE)

    if B <= _LANE:
        return B  # single full-extent block; always layout-legal

    d_pad = _round_up(D, _LANE)
    o_pad = _round_up(OUT, _SUBLANE)
    # f32, double-buffered x tile + double-buffered output tile, per batch row.
    bytes_per_row = 2 * 4 * (d_pad + o_pad)
    tm_budget = max(_LANE, (vmem_budget_bytes // bytes_per_row) // _LANE * _LANE)
    # >= 2 grid steps (multiple of 128) -> both v7x TCs active on "parallel".
    tm_two_steps = _round_up(pl.cdiv(B, 2), _LANE)
    return min(tm_budget, max_tile, tm_two_steps)


def client_model_forward(x, weight, bias, *, block_rows=None, out_layout="bo"):
    """y = x @ weight.T + bias  (equivalent to PyTorch nn.Linear forward).

    x:      (B, D)   f32
    weight: (OUT, D) f32   (PyTorch nn.Linear layout)
    bias:   (OUT,)   f32
    out_layout:
      "bo" (default): returns (B, OUT), exactly matching nn.Linear.
      "ob":           returns the lane-dense (OUT, B) slab the kernel writes,
                      skipping the wrapper relayout (preferred for large B).
    """
    B, D = x.shape
    OUT = weight.shape[0]

    tm = _choose_batch_tile(B, D, OUT, block_rows=block_rows)
    grid = (pl.cdiv(B, tm),)

    bias_col = bias.reshape(OUT, 1)  # column vector -> broadcasts along lanes

    out_t = pl.pallas_call(
        _linear_kernel,
        out_shape=jax.ShapeDtypeStruct((OUT, B), jnp.float32),
        grid=grid,
        in_specs=[
            pl.BlockSpec((tm, D), lambda i: (i, 0)),    # x: streamed per tile
            pl.BlockSpec((OUT, D), lambda i: (0, 0)),   # W: resident
            pl.BlockSpec((OUT, 1), lambda i: (0, 0)),   # b: resident
        ],
        out_specs=pl.BlockSpec((OUT, tm), lambda i: (0, i)),
        compiler_params=pltpu.CompilerParams(
            dimension_semantics=("parallel",),   # megacore split on v7x
            vmem_limit_bytes=32 << 20,           # big tiles fit v5e's scoped VMEM
        ),
    )(x, weight, bias_col)

    if out_layout == "ob":
        y = out_t
    else:
        y = out_t.T  # tiny (OUT, B) relayout; only pay it when (B, OUT) is required
    return y if y.dtype == x.dtype else y.astype(x.dtype)


def init_params(key, input_size, out_features=4):
    """Deterministic init matching nn.Linear's shapes (Kaiming-uniform-ish)."""
    kw, kb = jax.random.split(key)
    bound = 1.0 / jnp.sqrt(jnp.float32(input_size))
    weight = jax.random.uniform(
        kw, (out_features, input_size), jnp.float32, -bound, bound
    )
    bias = jax.random.uniform(kb, (out_features,), jnp.float32, -bound, bound)
    return weight, bias


if __name__ == "__main__":
    key = jax.random.PRNGKey(0)
    k_x, k_p = jax.random.split(key)

    batch = 256        # small, but enough to exercise a 2-step batch grid
    input_size = 32    # ClientModel(input_size)

    x = jax.random.normal(k_x, (batch, input_size), jnp.float32)
    weight, bias = init_params(k_p, input_size, out_features=4)

    # Default path: (B, OUT), exact nn.Linear semantics. Auto tile -> tm=128,
    # grid=(2,), so the partial/parallel tiling machinery is exercised.
    y = client_model_forward(x, weight, bias)
    y = jax.block_until_ready(y)

    # Lane-dense (OUT, B) fast path used by large-batch consumers.
    y_ob = client_model_forward(x, weight, bias, out_layout="ob")
    y_ob = jax.block_until_ready(y_ob)

    # Cross-check against plain JAX reference (same math as torch.nn.Linear).
    y_ref = x @ weight.T + bias
    assert y.shape == (batch, 4)
    assert y_ob.shape == (4, batch)
    assert jnp.allclose(y, y_ref, atol=1e-5, rtol=1e-5)
    assert jnp.allclose(y_ob.T, y_ref, atol=1e-5, rtol=1e-5)

    print("KERNEL_OK")
</pallas_src>

<mosaic_0001>
module attributes {stable_mosaic.version = 11 : i64} {
  func.func @_linear_kernel(%arg0: i32, %arg1: memref<128x32xf32, #tpu.memory_space<vmem>>, %arg2: memref<4x32xf32, #tpu.memory_space<vmem>>, %arg3: memref<4x1xf32, #tpu.memory_space<vmem>>, %arg4: memref<4x128xf32, #tpu.memory_space<vmem>>) attributes {dimension_semantics = [#tpu.dimension_semantics<parallel>], iteration_bounds = array<i64: 2>, scalar_prefetch = 0 : i64, scratch_operands = 0 : i64, tpu.core_type = #tpu.core_type<tc>, window_params = [{transform_indices = @transform_0, window_bounds = array<i64: 128, 32>}, {pipeline_mode = #tpu.pipeline_mode<synchronous>, transform_indices = @transform_1, window_bounds = array<i64: 4, 32>}, {pipeline_mode = #tpu.pipeline_mode<synchronous>, transform_indices = @transform_2, window_bounds = array<i64: 4, 1>}, {transform_indices = @transform_3, window_bounds = array<i64: 4, 128>}]} {
    %c0 = arith.constant 0 : index
    %c0_0 = arith.constant 0 : index
    %0 = vector.load %arg2[%c0, %c0_0] : memref<4x32xf32, #tpu.memory_space<vmem>>, vector<4x32xf32>
    %c0_1 = arith.constant 0 : index
    %c0_2 = arith.constant 0 : index
    %1 = vector.load %arg1[%c0_1, %c0_2] : memref<128x32xf32, #tpu.memory_space<vmem>>, vector<128x32xf32>
    %cst = arith.constant dense<0.000000e+00> : vector<4x128xf32>
    %2 = tpu.matmul %0, %1, %cst {dimension_numbers = #tpu.dot_dimension_numbers<[1], [1], [0], [0], [0, 0, 1, 0], [], []>} : vector<4x32xf32>, vector<128x32xf32>, vector<4x128xf32> -> vector<4x128xf32>
    %c0_3 = arith.constant 0 : index
    %c0_4 = arith.constant 0 : index
    %3 = vector.load %arg3[%c0_3, %c0_4] : memref<4x1xf32, #tpu.memory_space<vmem>>, vector<4x1xf32>
    %4 = vector.broadcast %3 : vector<4x1xf32> to vector<4x128xf32>
    %5 = arith.addf %2, %4 : vector<4x128xf32>
    %c0_5 = arith.constant 0 : index
    %c0_6 = arith.constant 0 : index
    %6 = vector.load %arg4[%c0_5, %c0_6] : memref<4x128xf32, #tpu.memory_space<vmem>>, vector<4x128xf32>
    tpu.vector_store %arg4[%c0_5, %c0_6], %5 {strides = array<i32>} : memref<4x128xf32, #tpu.memory_space<vmem>>, vector<4x128xf32>,
    return
  }
  func.func @transform_0(%arg0: i32) -> (i32, i32) {
    %c0_i32 = arith.constant 0 : i32
    %c0_i32_0 = arith.constant 0 : i32
    return %arg0, %c0_i32 : i32, i32
  }
  func.func @transform_1(%arg0: i32) -> (i32, i32) {
    %c0_i32 = arith.constant 0 : i32
    %c0_i32_0 = arith.constant 0 : i32
    %c0_i32_1 = arith.constant 0 : i32
    return %c0_i32, %c0_i32_0 : i32, i32
  }
  func.func @transform_2(%arg0: i32) -> (i32, i32) {
    %c0_i32 = arith.constant 0 : i32
    %c0_i32_0 = arith.constant 0 : i32
    %c0_i32_1 = arith.constant 0 : i32
    return %c0_i32, %c0_i32_0 : i32, i32
  }
  func.func @transform_3(%arg0: i32) -> (i32, i32) {
    %c0_i32 = arith.constant 0 : i32
    %c0_i32_0 = arith.constant 0 : i32
    return %c0_i32, %arg0 : i32, i32
  }
}

</mosaic_0001>

<llo_original>
// kernel: tpu_custom_call.1
$region0: #{tpu_custom_call.1}
  #allocation0 [shape = 'u32[]', space=smem, size = 0x4, offset = 0x4, fixed_abs, tag = 'smem constant byte address 0x4 - core index']
  #allocation1 [shape = 'u32[144,128]{1,0:T(1,128)}', space=vmem, size = 0x12000, scoped, tag = 'internal scratch']
  %s0 = inlined_call_operand.vmem [shape: f32[256,32], index: 0, kind: input, shape index: {}]
  %s1 = inlined_call_operand.vmem [shape: f32[4,32], index: 1, kind: input, shape index: {}]
  %s2 = inlined_call_operand.vmem [shape: f32[4,1], index: 2, kind: input, shape index: {}]
  %s3 = inlined_call_operand.hbm [shape: f32[4,256], index: 3, kind: output, shape index: {}]
  %s4 = sld [smem:[#allocation0]]
  $region45: #{tpu_custom_call.1} parent=0
    _
  %s6 = ssub.s32 1, %s4
  %s7 = scalar_select 0, %s6, %s4
  $region1: #{tpu_custom_call.1} parent=0
    #allocation2 [shape = 'u8[4096]{0}', space=vmem, size = 0x1000, scoped, tag = 'output window, operand 0']
    #allocation3 [shape = 's32[2]{0}', space=sflag, size = 0x8, scoped, tag = 'scoped memory for tpu_custom_call.1']
    %8 = vsyncpa [#allocation3], 0
    %s9 = scalar_lea.sflag [#allocation3], 1
    %10 = vsyncpa %s9, 0
    loop: start=0, step=1, limit=4
    $region2: #{tpu_custom_call.1} parent=1 // loop_pre_header
      _
    $region3: #{tpu_custom_call.1} parent=1 // loop_header
      %s12 = sphi 0, %s16
      %p13 = scmp.ge.s32.totalorder %s12, 4
      %s22 = sphi 0, %s24
      %s25 = sphi 0, %s22
      %s26 = sphi 0, %s25
      %s42 = sphi 0, %s26
      %s46 = sphi 0, %s46
      %s48 = sphi 0, %s46
      %s49 = sphi 0, %s48
      %s63 = sphi 0, %s49
      %s67 = sphi 0, %s67
      %s69 = sphi 0, %s67
      %s70 = sphi 0, %s69
      %s84 = sphi 0, %s70
      %s90 = sphi 0, %s92
      %s93 = sphi 0, %s90
      %s94 = sphi 0, %s93
      %s110 = sphi 0, %s94
    $region4: #{tpu_custom_call.1} parent=1 // loop_header_branch
      %15 = sbr.rel (%p13) target = $region8
    $region5: #{tpu_custom_call.1} parent=1 // loop_body
      %s17 = ssub.s32 %s12, 1
      %s18 = ssub.s32 %s12, 2
      %s19 = sadd.s32 %s12, 1
      %s20 = ssub.s32 %s12, %s19
      %p21 = scmp.eq.s32.totalorder %s20, 0
      %s23 = sadd.s32 %s22, 1
      %s24 = scalar_select %p21, %s22, %s23
      %p27 = pneg %p21
      %p28 = scmp.eq.s32.totalorder %s12, 1
      %p29 = por %p27, %p28
      %p30 = scmp.ne.s32.totalorder %s22, %s25
      %p31 = scmp.eq.s32.totalorder %s12, 0
      %p32 = por %p30, %p31
      %p33 = scmp.ne.s32.totalorder %s22, %s25
      %p34 = scmp.eq.s32.totalorder %s17, 1
      %p35 = por %p33, %p34
      %p36 = scmp.ne.s32.totalorder %s25, %s26
      %p37 = scmp.eq.s32.totalorder %s17, 0
      %p38 = por %p36, %p37
      %p39 = scmp.ne.s32.totalorder %s25, %s26
      %p40 = scmp.eq.s32.totalorder %s18, 1
      %p41 = por %p39, %p40
      %p43 = scmp.ne.s32.totalorder %s26, %s42
      %p44 = scmp.eq.s32.totalorder %s18, 0
      %p45 = por %p43, %p44
      %s47 = sadd.s32 %s46, 1
      %p50 = scmp.eq.s32.totalorder %s12, 1
      %p51 = scmp.ne.s32.totalorder %s46, %s48
      %p52 = scmp.eq.s32.totalorder %s12, 0
      %p53 = por %p51, %p52
      %p54 = scmp.ne.s32.totalorder %s46, %s48
      %p55 = scmp.eq.s32.totalorder %s17, 1
      %p56 = por %p54, %p55
      %p57 = scmp.ne.s32.totalorder %s48, %s49
      %p58 = scmp.eq.s32.totalorder %s17, 0
      %p59 = por %p57, %p58
      %p60 = scmp.ne.s32.totalorder %s48, %s49
      %p61 = scmp.eq.s32.totalorder %s18, 1
      %p62 = por %p60, %p61
      %p64 = scmp.ne.s32.totalorder %s49, %s63
      %p65 = scmp.eq.s32.totalorder %s18, 0
      %p66 = por %p64, %p65
      %s68 = sadd.s32 %s67, 1
      %p71 = scmp.eq.s32.totalorder %s12, 1
      %p72 = scmp.ne.s32.totalorder %s67, %s69
      %p73 = scmp.eq.s32.totalorder %s12, 0
      %p74 = por %p72, %p73
      %p75 = scmp.ne.s32.totalorder %s67, %s69
      %p76 = scmp.eq.s32.totalorder %s17, 1
      %p77 = por %p75, %p76
      %p78 = scmp.ne.s32.totalorder %s69, %s70
      %p79 = scmp.eq.s32.totalorder %s17, 0
      %p80 = por %p78, %p79
      %p81 = scmp.ne.s32.totalorder %s69, %s70
      %p82 = scmp.eq.s32.totalorder %s18, 1
      %p83 = por %p81, %p82
      %p85 = scmp.ne.s32.totalorder %s70, %s84
      %p86 = scmp.eq.s32.totalorder %s18, 0
      %p87 = por %p85, %p86
      %s88 = ssub.s32 %s12, %s19
      %p89 = scmp.eq.s32.totalorder %s88, 0
      %s91 = sadd.s32 %s90, 1
      %s92 = scalar_select %p89, %s90, %s91
      %p95 = pneg %p89
      %p96 = scmp.eq.s32.totalorder %s12, 1
      %p97 = por %p95, %p96
      %p98 = scmp.ne.s32.totalorder %s90, %s93
      %p99 = scmp.eq.s32.totalorder %s12, 0
      %p100 = por %p98, %p99
      %p101 = scmp.ne.s32.totalorder %s90, %s93
      %p102 = scmp.eq.s32.totalorder %s17, 1
      %p103 = por %p101, %p102
      %p104 = scmp.ne.s32.totalorder %s93, %s94
      %p105 = scmp.eq.s32.totalorder %s17, 0
      %p106 = por %p104, %p105
      %p107 = scmp.ne.s32.totalorder %s93, %s94
      %p108 = scmp.eq.s32.totalorder %s18, 1
      %p109 = por %p107, %p108
      %p111 = scmp.ne.s32.totalorder %s94, %s110
      %p112 = scmp.eq.s32.totalorder %s18, 0
      %p113 = por %p111, %p112
      %p114 = scmp.le.s32.totalorder 1, %s12
      %p115 = scmp.lt.s32.totalorder %s12, 3
      %p116 = pnand %p114, %p115
      %p117 = pneg %p116
      // Predicated region
      $region9: #{tpu_custom_call.1} parent=5 // pred_check
        _
      $region10: #{tpu_custom_call.1} parent=5 // pred_check_branch
        %119 = sbr.rel (%p116) target = $region12
      $region11: #{tpu_custom_call.1} parent=5 // pred_region
        %s120 = ssub.s32 %s12, 1
        // Predicated region
        $region13: #{tpu_custom_call.1} parent=11 // pred_check
          %p121 = pneg %p59
        $region14: #{tpu_custom_call.1} parent=11 // pred_check_branch
          %123 = sbr.rel (%p121) target = $region16
        $region15: #{tpu_custom_call.1} parent=11 // pred_region
          _
        $region16: #{tpu_custom_call.1} parent=11 // pred_fallthru
          _
        // Predicated region
        $region17: #{tpu_custom_call.1} parent=11 // pred_check
          %p124 = pneg %p80
        $region18: #{tpu_custom_call.1} parent=11 // pred_check_branch
          %126 = sbr.rel (%p124) target = $region20
        $region19: #{tpu_custom_call.1} parent=11 // pred_region
          _
        $region20: #{tpu_custom_call.1} parent=11 // pred_fallthru
          _
      $region12: #{tpu_custom_call.1} parent=5 // pred_fallthru
        _
      %p127 = scmp.lt.s32.totalorder %s12, 2
      // Predicated region
      $region21: #{tpu_custom_call.1} parent=5 // pred_check
        %p128 = pneg %p127
      $region22: #{tpu_custom_call.1} parent=5 // pred_check_branch
        %130 = sbr.rel (%p128) target = $region24
      $region23: #{tpu_custom_call.1} parent=5 // pred_region
        // Predicated region
        $region25: #{tpu_custom_call.1} parent=23 // pred_check
          %p131 = pneg %p32
        $region26: #{tpu_custom_call.1} parent=23 // pred_check_branch
          %133 = sbr.rel (%p131) target = $region28
        $region27: #{tpu_custom_call.1} parent=23 // pred_region
          %s134 = smul.u32 16, %s12
          %p135 = scmp.lt.s32.totalorder %s134, 31
          %s136 = scalar_select %p135, %s134, 31
          %s137 = smul.addr %s136, 8
          %s138 = scalar_lea.vmem %s0, %s137
          %s139 = smul.u32 16, %s12
        $region28: #{tpu_custom_call.1} parent=23 // pred_fallthru
          _
      $region24: #{tpu_custom_call.1} parent=5 // pred_fallthru
        _
      %p140 = scmp.le.s32.totalorder 1, %s12
      %p141 = scmp.lt.s32.totalorder %s12, 3
      %p142 = pnand %p140, %p141
      %p143 = pneg %p142
      // Predicated region
      $region29: #{tpu_custom_call.1} parent=5 // pred_check
        _
      $region30: #{tpu_custom_call.1} parent=5 // pred_check_branch
        %145 = sbr.rel (%p142) target = $region32
      $region31: #{tpu_custom_call.1} parent=5 // pred_region
        %s146 = ssub.s32 %s12, 1
        %s147 = smul.u32 16, %s17
        %p148 = scmp.lt.s32.totalorder %s147, 31
        %s149 = scalar_select %p148, %s147, 31
        %s150 = smul.addr %s149, 8
        %s151 = scalar_lea.vmem %s0, %s150
        %p152 = pneg %p38
        %p153 = pneg %p35
        %p154 = pneg %p59
        %p155 = pneg %p56
        %p156 = pneg %p80
        %p157 = pneg %p77
        %p158 = pneg %p106
        %p159 = pneg %p103
        %s160 = sand.u32 %s93, 1
        %s161 = scalar_lea.sflag [#allocation3], %s160
        %s162 = sand.u32 %s93, 1
        %s163 = smul.addr %s162, 4
        %s164 = scalar_lea.vmem [#allocation2], %s163
        %s165 = smul.u32 16, %s17
        %p166 = scmp.lt.s32.totalorder %s165, 31
        %s167 = scalar_select %p166, %s165, 31
        %s168 = smul.addr %s167, 8
        %s169 = scalar_lea.vmem %s0, %s168
        %s170 = smul.u32 16, %s17
        %v171 = vld [vmem:[%s1] sm:$0xf]
        %v172 = vld [vmem:[%s169] sm:$0xff]
        %v173 = vld [vmem:[%s169 + $0x8] sm:$0xff]
        %v174 = vld [vmem:[%s169 + $0x10] sm:$0xff]
        %v175 = vld [vmem:[%s169 + $0x18] sm:$0xff]
        %v176 = vld [vmem:[%s169 + $0x20] sm:$0xff]
        %v177 = vld [vmem:[%s169 + $0x28] sm:$0xff]
        %v178 = vld [vmem:[%s169 + $0x30] sm:$0xff]
        %v179 = vld [vmem:[%s169 + $0x38] sm:$0xff]
        %v180 = vld [vmem:[%s169 + $0x40] sm:$0xff]
        %v181 = vld [vmem:[%s169 + $0x48] sm:$0xff]
        %v182 = vld [vmem:[%s169 + $0x50] sm:$0xff]
        %v183 = vld [vmem:[%s169 + $0x58] sm:$0xff]
        %v184 = vld [vmem:[%s169 + $0x60] sm:$0xff]
        %v185 = vld [vmem:[%s169 + $0x68] sm:$0xff]
        %v186 = vld [vmem:[%s169 + $0x70] sm:$0xff]
        %v187 = vld [vmem:[%s169 + $0x78] sm:$0xff]
        %v188 = vld [vmem:[%s2] sm:$0xf]
        %190 = vset.pattern.permute.xlu0 0
        %191 = vperm.xlu0 %190, %v188
        %v192 = vpop.permute.xlu0 %191
        %vm194 = vcmask 261120
        %v196 = vsel %vm194, %v171, 0
        %v199 = vsel %vm194, %v172, 0
        %v202 = vsel %vm194, %v173, 0
        %v205 = vsel %vm194, %v174, 0
        %v208 = vsel %vm194, %v175, 0
        %v211 = vsel %vm194, %v176, 0
        %v214 = vsel %vm194, %v177, 0
        %v217 = vsel %vm194, %v178, 0
        %v220 = vsel %vm194, %v179, 0
        %v223 = vsel %vm194, %v180, 0
        %v226 = vsel %vm194, %v181, 0
        %v229 = vsel %vm194, %v182, 0
        %v232 = vsel %vm194, %v183, 0
        %v235 = vsel %vm194, %v184, 0
        %v238 = vsel %vm194, %v185, 0
        %v241 = vsel %vm194, %v186, 0
        %v244 = vsel %vm194, %v187, 0
        %246 = vmatprep.subr.mxu0 0.0
        %247 = vmatpush1.xpose.msra.mxu0 %v199
        %248 = vmatprep.subr.mxu0 0.0
        %249 = vmatpush1.xpose.msra.mxu0 %v202
        %250 = vmatprep.subr.mxu0 0.0
        %251 = vmatpush1.xpose.msra.mxu0 %v205
        %252 = vmatprep.subr.mxu0 0.0
        %253 = vmatpush1.xpose.msra.mxu0 %v208
        %254 = vmatprep.subr.mxu0 0.0
        %255 = vmatpush1.xpose.msra.mxu0 %v211
        %256 = vmatprep.subr.mxu0 0.0
        %257 = vmatpush1.xpose.msra.mxu0 %v214
        %258 = vmatprep.subr.mxu0 0.0
        %259 = vmatpush1.xpose.msra.mxu0 %v217
        %260 = vmatprep.subr.mxu0 0.0
        %261 = vmatpush1.xpose.msra.mxu0 %v220
        %262 = vmatprep.subr.mxu0 0.0
        %263 = vmatpush1.xpose.msra.mxu0 %v223
        %264 = vmatprep.subr.mxu0 0.0
        %265 = vmatpush1.xpose.msra.mxu0 %v226
        %266 = vmatprep.subr.mxu0 0.0
        %267 = vmatpush1.xpose.msra.mxu0 %v229
        %268 = vmatprep.subr.mxu0 0.0
        %269 = vmatpush1.xpose.msra.mxu0 %v232
        %270 = vmatprep.subr.mxu0 0.0
        %271 = vmatpush1.xpose.msra.mxu0 %v235
        %272 = vmatprep.subr.mxu0 0.0
        %273 = vmatpush1.xpose.msra.mxu0 %v238
        %274 = vmatprep.subr.mxu0 0.0
        %275 = vmatpush1.xpose.msra.mxu0 %v241
        %276 = vmatprep.subr.mxu0 0.0
        %277 = vmatpush1.xpose.msra.mxu0 %v244
        %278 = vmatprep.subr.mxu0 0.0
        %279 = vmatpush1.xpose.msra.mxu0 0.0
        %280 = vmatprep.subr.mxu0 0.0
        %281 = vmatpush1.xpose.msra.mxu0 0.0
        %282 = vmatprep.subr.mxu0 0.0
        %283 = vmatpush1.xpose.msra.mxu0 0.0
        %284 = vmatprep.subr.mxu0 0.0
        %285 = vmatpush1.xpose.msra.mxu0 0.0
        %286 = vmatprep.subr.mxu0 0.0
        %287 = vmatpush1.xpose.msra.mxu0 0.0
        %288 = vmatprep.subr.mxu0 0.0
        %289 = vmatpush1.xpose.msra.mxu0 0.0
        %290 = vmatprep.subr.mxu0 0.0
        %291 = vmatpush1.xpose.msra.mxu0 0.0
        %292 = vmatprep.subr.mxu0 0.0
        %293 = vmatpush1.xpose.msra.mxu0 0.0
        %294 = vmatprep.subr.mxu0 0.0
        %295 = vmatpush1.xpose.msra.mxu0 0.0
        %296 = vmatprep.subr.mxu0 0.0
        %297 = vmatpush1.xpose.msra.mxu0 0.0
        %298 = vmatprep.subr.mxu0 0.0
        %299 = vmatpush1.xpose.msra.mxu0 0.0
        %300 = vmatprep.subr.mxu0 0.0
        %301 = vmatpush1.xpose.msra.mxu0 0.0
        %302 = vmatprep.subr.mxu0 0.0
        %303 = vmatpush1.xpose.msra.mxu0 0.0
        %304 = vmatprep.subr.mxu0 0.0
        %305 = vmatpush1.xpose.msra.mxu0 0.0
        %306 = vmatprep.subr.mxu0 0.0
        %307 = vmatpush1.xpose.msra.mxu0 0.0
        %308 = vmatprep.subr.mxu0 0.0
        %309 = vmatpush1.xpose.msra.mxu0 0.0
        %310 = vmatprep.mubr.f32.mxu0 0.0
        %311 = vmatmul.mubr.f32.gmra.mrb[0].mxu0 %v196
        %v312 = vpop.f32.mrb[0].mxu0
        %v313 = vadd.f32 %v192, %v312
        %v314 = vpop.f32.mrb[0].mxu0
        %315 = vdwg.mxu0
        %316 = vst [vmem:[%s164] sm:$0xf] %v313
        %s317 = sand.u32 %s93, 1
        %s318 = scalar_lea.sflag [#allocation3], %s317
        %s319 = sand.u32 %s93, 1
        %s320 = smul.addr %s319, 4
        %s321 = scalar_lea.vmem [#allocation2], %s320
        // Predicated region
        $region33: #{tpu_custom_call.1} parent=31 // pred_check
          %p322 = pneg %p103
        $region34: #{tpu_custom_call.1} parent=31 // pred_check_branch
          %324 = sbr.rel (%p322) target = $region36
        $region35: #{tpu_custom_call.1} parent=31 // pred_region
          %s326 = ssub.s32 64, 64
          %327 = vsyncadd %s318, %s326
          %s328 = smul.addr %s17, 64
          %s329 = scalar_lea.hbm %s3, %s328
          %s331 = sshll.u32 %s321, 4
          %s332 = int_to_ptr.vmem [resolvable:$true] %s331
          %334 = dma.vmem_to_hbm [thread:$0]  %s332, 64, %s329, %s318
        $region36: #{tpu_custom_call.1} parent=31 // pred_fallthru
          _
      $region32: #{tpu_custom_call.1} parent=5 // pred_fallthru
        _
      %p335 = scmp.le.s32.totalorder 2, %s12
      // Predicated region
      $region37: #{tpu_custom_call.1} parent=5 // pred_check
        %p336 = pneg %p335
      $region38: #{tpu_custom_call.1} parent=5 // pred_check_branch
        %338 = sbr.rel (%p336) target = $region40
      $region39: #{tpu_custom_call.1} parent=5 // pred_region
        %s339 = ssub.s32 %s12, 2
        // Predicated region
        $region41: #{tpu_custom_call.1} parent=39 // pred_check
          %p340 = pneg %p109
        $region42: #{tpu_custom_call.1} parent=39 // pred_check_branch
          %342 = sbr.rel (%p340) target = $region44
        $region43: #{tpu_custom_call.1} parent=39 // pred_region
          %s343 = sand.u32 %s94, 1
          %s344 = scalar_lea.sflag [#allocation3], %s343
          %s345 = sand.u32 %s94, 1
          %s346 = smul.addr %s345, 4
          %s347 = scalar_lea.vmem [#allocation2], %s346
          %348 = dma.done %s344, 64
        $region44: #{tpu_custom_call.1} parent=39 // pred_fallthru
          _
      $region40: #{tpu_custom_call.1} parent=5 // pred_fallthru
        _
    $region6: #{tpu_custom_call.1} parent=1 // loop_footer
      %s16 = sadd.s32 1, %s12
    $region7: #{tpu_custom_call.1} parent=1 // loop_footer_branch
      %11 = sbr.rel target = $region3
    $region8: #{tpu_custom_call.1} parent=1 // loop_exit
      _
    %349 = vsyncpa [#allocation3], 1
    %s350 = scalar_lea.sflag [#allocation3], 1
    %351 = vsyncpa %s350, 1

</llo_original>
